<compile_context>
chip_gen: v7x
topology: tpu7x:2x2x1
jax: 0.10.0
libtpu: 0.0.40
codegen_flags: <defaults>
</compile_context>

<pallas_src>
import functools

import jax
import jax.numpy as jnp
from jax.experimental import pallas as pl
from jax.experimental.pallas import tpu as pltpu


def _group_sum_kernel(x_ref, o_ref, acc_ref, *, inv_tau: float):
    """One (row-tile, group-chunk) tile: accumulate row sums into f32 scratch."""
    j = pl.program_id(1)

    @pl.when(j == 0)
    def _init():
        acc_ref[...] = jnp.zeros_like(acc_ref)

    # Lane-axis (XLU) reduction of the current chunk, accumulated in f32.
    acc_ref[...] += jnp.sum(x_ref[...], axis=1, keepdims=True, dtype=jnp.float32)

    @pl.when(j == pl.num_programs(1) - 1)
    def _finalize():
        o_ref[...] = (acc_ref[...] * inv_tau).astype(o_ref.dtype)


def _pick_tile(dim: int, pref: int, align: int) -> int:
    """Largest tile <= pref that is a multiple of `align` and divides `dim`;
    falls back to the full extent (always a legal block dim)."""
    if dim <= pref:
        return dim
    t = (pref // align) * align
    while t >= align:
        if dim % t == 0:
            return t
        t -= align
    return dim


def group_sum(x: jax.Array, k: int, tau: float = 1.0) -> jax.Array:
    """Pallas equivalent of GroupSum.forward: [B, N] -> [B, k]."""
    b, n = x.shape
    assert n % k == 0, f"Input dimension {n} must be divisible by k={k}"
    g = n // k
    rows = b * k

    # Free contiguous reshape in the wrapper: each output bit owns one row of g values.
    x2 = x.reshape(rows, g)

    itemsize = jnp.dtype(x.dtype).itemsize
    sub_align = max(8, 32 // itemsize)      # 8 for f32, 16 for bf16, 32 for int8
    tb = _pick_tile(rows, 512, sub_align)   # sublane (row) tile
    tg = _pick_tile(g, 2048, 128)           # lane (group-axis) tile

    grid = (rows // tb, g // tg)
    kernel = functools.partial(_group_sum_kernel, inv_tau=float(1.0 / tau))

    out = pl.pallas_call(
        kernel,
        out_shape=jax.ShapeDtypeStruct((rows, 1), x.dtype),
        grid_spec=pltpu.PrefetchScalarGridSpec(
            num_scalar_prefetch=0,
            grid=grid,
            in_specs=[pl.BlockSpec((tb, tg), lambda i, j: (i, j))],
            # Output block stays resident across the reduction axis j.
            out_specs=pl.BlockSpec((tb, 1), lambda i, j: (i, 0)),
            scratch_shapes=[pltpu.VMEM((tb, 1), jnp.float32)],
        ),
        compiler_params=pltpu.CompilerParams(
            dimension_semantics=("parallel", "arbitrary"),
        ),
    )(x2)

    return out.reshape(b, k)


if __name__ == "__main__":
    key = jax.random.PRNGKey(0)
    k0, k1 = jax.random.split(key)

    # Case 1: small shape consistent with the PyTorch module ([batch, n], n = k * group).
    batch, k, group, tau = 2, 4, 8, 2.0
    x = jax.random.normal(k0, (batch, k * group), dtype=jnp.float32)
    out = jax.block_until_ready(group_sum(x, k=k, tau=tau))
    ref = x.reshape(batch, k, -1).sum(axis=2) / tau
    assert out.shape == (batch, k)
    assert jnp.allclose(out, ref, atol=1e-5, rtol=1e-5), "mismatch vs reference (small)"

    # Case 2: larger shape exercising the tiled grid + multi-chunk accumulation path.
    batch2, k2, group2, tau2 = 8, 16, 4096, 3.0
    x2 = jax.random.normal(k1, (batch2, k2 * group2), dtype=jnp.float32)
    out2 = jax.block_until_ready(group_sum(x2, k=k2, tau=tau2))
    ref2 = x2.reshape(batch2, k2, -1).sum(axis=2) / tau2
    assert out2.shape == (batch2, k2)
    assert jnp.allclose(out2, ref2, atol=1e-3, rtol=1e-3), "mismatch vs reference (tiled)"

    print("KERNEL_OK")
</pallas_src>

<mosaic_0001>
module attributes {stable_mosaic.version = 11 : i64} {
  func.func @_group_sum_kernel(%arg0: i32, %arg1: i32, %arg2: memref<8x8xf32, #tpu.memory_space<vmem>>, %arg3: memref<8x1xf32, #tpu.memory_space<vmem>>, %arg4: memref<8x1xf32, #tpu.memory_space<vmem>>) attributes {dimension_semantics = [#tpu.dimension_semantics<parallel>, #tpu.dimension_semantics<arbitrary>], iteration_bounds = array<i64: 1, 1>, scalar_prefetch = 0 : i64, scratch_operands = 1 : i64, tpu.core_type = #tpu.core_type<tc>, window_params = [{transform_indices = @transform_0, window_bounds = array<i64: 8, 8>}, {transform_indices = @transform_1, window_bounds = array<i64: 8, 1>}]} {
    %c0_i32 = arith.constant 0 : i32
    %0 = arith.cmpi eq, %arg1, %c0_i32 : i32
    %1 = arith.extui %0 : i1 to i32
    %c0_i32_0 = arith.constant 0 : i32
    %2 = arith.cmpi ne, %1, %c0_i32_0 : i32
    scf.if %2 {
      %cst_8 = arith.constant 0.000000e+00 : f32
      %12 = vector.broadcast %cst_8 : f32 to vector<8x1xf32>
      %c0_9 = arith.constant 0 : index
      %c0_10 = arith.constant 0 : index
      %13 = vector.load %arg4[%c0_9, %c0_10] : memref<8x1xf32, #tpu.memory_space<vmem>>, vector<8x1xf32>
      tpu.vector_store %arg4[%c0_9, %c0_10], %12 {strides = array<i32>} : memref<8x1xf32, #tpu.memory_space<vmem>>, vector<8x1xf32>,
    } else {
    }
    %c0 = arith.constant 0 : index
    %c0_1 = arith.constant 0 : index
    %3 = vector.load %arg4[%c0, %c0_1] : memref<8x1xf32, #tpu.memory_space<vmem>>, vector<8x1xf32>
    %c0_2 = arith.constant 0 : index
    %c0_3 = arith.constant 0 : index
    %4 = vector.load %arg2[%c0_2, %c0_3] : memref<8x8xf32, #tpu.memory_space<vmem>>, vector<8x8xf32>
    %cst = arith.constant dense<0.000000e+00> : vector<8xf32>
    %5 = vector.multi_reduction <add>, %4, %cst [1] : vector<8x8xf32> to vector<8xf32>
    %6 = vector.shape_cast %5 : vector<8xf32> to vector<8x1xf32>
    %7 = arith.addf %3, %6 : vector<8x1xf32>
    %c0_4 = arith.constant 0 : index
    %c0_5 = arith.constant 0 : index
    %8 = vector.load %arg4[%c0_4, %c0_5] : memref<8x1xf32, #tpu.memory_space<vmem>>, vector<8x1xf32>
    tpu.vector_store %arg4[%c0_4, %c0_5], %7 {strides = array<i32>} : memref<8x1xf32, #tpu.memory_space<vmem>>, vector<8x1xf32>,
    %c0_i32_6 = arith.constant 0 : i32
    %9 = arith.cmpi eq, %arg1, %c0_i32_6 : i32
    %10 = arith.extui %9 : i1 to i32
    %c0_i32_7 = arith.constant 0 : i32
    %11 = arith.cmpi ne, %10, %c0_i32_7 : i32
    scf.if %11 {
      %c0_8 = arith.constant 0 : index
      %c0_9 = arith.constant 0 : index
      %12 = vector.load %arg4[%c0_8, %c0_9] : memref<8x1xf32, #tpu.memory_space<vmem>>, vector<8x1xf32>
      %cst_10 = arith.constant 5.000000e-01 : f32
      %13 = vector.broadcast %cst_10 : f32 to vector<8x1xf32>
      %14 = arith.mulf %12, %13 : vector<8x1xf32>
      %c0_11 = arith.constant 0 : index
      %c0_12 = arith.constant 0 : index
      %15 = vector.load %arg3[%c0_11, %c0_12] : memref<8x1xf32, #tpu.memory_space<vmem>>, vector<8x1xf32>
      tpu.vector_store %arg3[%c0_11, %c0_12], %14 {strides = array<i32>} : memref<8x1xf32, #tpu.memory_space<vmem>>, vector<8x1xf32>,
    } else {
    }
    return
  }
  func.func @transform_0(%arg0: i32, %arg1: i32) -> (i32, i32) {
    %c0_i32 = arith.constant 0 : i32
    return %arg0, %arg1 : i32, i32
  }
  func.func @transform_1(%arg0: i32, %arg1: i32) -> (i32, i32) {
    %c0_i32 = arith.constant 0 : i32
    %c0_i32_0 = arith.constant 0 : i32
    return %arg0, %c0_i32 : i32, i32
  }
}

</mosaic_0001>

<llo_original>
// kernel: tpu_custom_call.1
$region0: #{tpu_custom_call.1}
  #allocation0 [shape = 'u32[]', space=smem, size = 0x4, offset = 0x4, fixed_abs, tag = 'smem constant byte address 0x4 - core index']
  #allocation1 [shape = 'u32[144,128]{1,0:T(1,128)}', space=vmem, size = 0x12000, scoped, tag = 'internal scratch']
  #allocation2 [shape = 'f32[8,1]{1,0:T(8,128)}', space=vmem, size = 0x1000, scoped, tag = 'scratch operand']
  %s0 = inlined_call_operand.hbm [shape: f32[8,8], index: 0, kind: input, shape index: {}]
  %s1 = inlined_call_operand.vmem [shape: f32[8,1], index: 1, kind: output, shape index: {}]
  %s2 = sld [smem:[#allocation0]]
  $region26: #{tpu_custom_call.1} parent=0
    _
  %s4 = ssub.s32 1, %s2
  %s5 = scalar_select 0, %s4, %s2
  $region1: #{tpu_custom_call.1} parent=0
    #allocation3 [shape = 'u8[4096]{0}', space=vmem, size = 0x1000, scoped, tag = 'input window, operand 0, single buffered']
    #allocation4 [shape = 's32[1]{0}', space=sflag, size = 0x4, scoped, tag = 'scoped memory for tpu_custom_call.1']
    %6 = vsyncpa [#allocation4], 0
    // Predicated region
    $region2: #{tpu_custom_call.1} parent=1 // pred_check
      _
    $region3: #{tpu_custom_call.1} parent=1 // pred_check_branch
      %8 = sbr.rel (0) target = $region5
    $region4: #{tpu_custom_call.1} parent=1 // pred_region
      %s10 = ssub.s32 128, 128
      %11 = vsyncadd [#allocation4], %s10
      %s13 = sshll.u32 [#allocation3], 4
      %s14 = int_to_ptr.vmem [resolvable:$true] %s13
      %16 = dma.hbm_to_vmem [thread:$0]  %s0, 128, %s14, [#allocation4]
    $region5: #{tpu_custom_call.1} parent=1 // pred_fallthru
      _
    // Predicated region
    $region6: #{tpu_custom_call.1} parent=1 // pred_check
      _
    $region7: #{tpu_custom_call.1} parent=1 // pred_check_branch
      %18 = sbr.rel (0) target = $region9
    $region8: #{tpu_custom_call.1} parent=1 // pred_region
      %19 = dma.done [#allocation4], 128
    $region9: #{tpu_custom_call.1} parent=1 // pred_fallthru
      _
    %p20 = scmp.eq.s32.totalorder 0, 0
    // Predicated region
    $region10: #{tpu_custom_call.1} parent=1 // pred_check
      %p21 = pneg %p20
    $region11: #{tpu_custom_call.1} parent=1 // pred_check_branch
      %23 = sbr.rel (%p21) target = $region13
    $region12: #{tpu_custom_call.1} parent=1 // pred_region
      %vm24 = vcmask 7168
      %25 = vst.msk [vmem:[#allocation2] sm:$0xff] %vm24, 0.0
    $region13: #{tpu_custom_call.1} parent=1 // pred_fallthru
      _
    %v26 = vld [vmem:[#allocation2] sm:$0xff]
    %v27 = vld [vmem:[#allocation3] sm:$0xff]
    %vm28 = vcmask 64512
    %v29 = vsel %vm28, %v27, 0.0
    %30 = vadd.xlane.f32.xlu0 %v29
    %v31 = vpop.xlane.xlu0 %30
    %v32 = vadd.f32 %v26, %v31
    %vm33 = vcmask 7168
    %34 = vst.msk [vmem:[#allocation2] sm:$0xff] %vm33, %v32
    // Predicated region
    $region14: #{tpu_custom_call.1} parent=1 // pred_check
      %p35 = pneg %p20
    $region15: #{tpu_custom_call.1} parent=1 // pred_check_branch
      %37 = sbr.rel (%p35) target = $region17
    $region16: #{tpu_custom_call.1} parent=1 // pred_region
      %v38 = vld [vmem:[#allocation2] sm:$0xff]
      %v39 = vmul.f32 %v38, 0.5
      %40 = vst.msk [vmem:[%s1] sm:$0xff] %vm33, %v39
    $region17: #{tpu_custom_call.1} parent=1 // pred_fallthru
      _
    // Predicated region
    $region18: #{tpu_custom_call.1} parent=1 // pred_check
      _
    $region19: #{tpu_custom_call.1} parent=1 // pred_check_branch
      %42 = sbr.rel (0) target = $region21
    $region20: #{tpu_custom_call.1} parent=1 // pred_region
      _
    $region21: #{tpu_custom_call.1} parent=1 // pred_fallthru
      _
    // Predicated region
    $region22: #{tpu_custom_call.1} parent=1 // pred_check
      _
    $region23: #{tpu_custom_call.1} parent=1 // pred_check_branch
      %44 = sbr.rel (0) target = $region25
    $region24: #{tpu_custom_call.1} parent=1 // pred_region
      _
    $region25: #{tpu_custom_call.1} parent=1 // pred_fallthru
      _
    %45 = vsyncpa [#allocation4], 1

</llo_original>
